<compile_context>
chip_gen: v7x
topology: tpu7x:2x2x1
jax: 0.10.0
libtpu: 0.0.40
codegen_flags: <defaults>
</compile_context>

<pallas_src>
import jax
import jax.numpy as jnp
from jax.experimental import pallas as pl
from jax.experimental.pallas import tpu as pltpu


def _asc_kernel(x_ref, o_ref):
    x = x_ref[...]                                       # (C, TN) tile
    xf = x.astype(jnp.float32)                           # f32 accumulate (bf16-safe)
    s = jnp.sum(xf, axis=0, keepdims=True)               # (1, TN) sum over dim 0
    scale = pl.reciprocal(s, approx=False) * 100.0       # one reciprocal per lane, *100 folded in
    o_ref[...] = (xf * scale).astype(o_ref.dtype)        # single broadcast multiply


def asc(x: jax.Array,
        *,
        max_tile_n: int = 2048,
        vmem_budget_bytes: int = 20 * 1024 * 1024) -> jax.Array:
    """ASC forward: x / sum(x, axis=0) * 100.

    Accepts any rank >= 1; non-leading dims are flattened into the lane axis.
    """
    orig_shape = x.shape
    if x.ndim == 1:
        x2 = x.reshape(x.shape[0], 1)
    elif x.ndim == 2:
        x2 = x
    else:
        x2 = x.reshape(x.shape[0], -1)

    C, N = x2.shape
    itemsize = jnp.dtype(x2.dtype).itemsize

    # Size the lane tile against a conservative VMEM budget that fits every
    # generation (v7x: 64 MiB physical / 32 MiB default scoped limit):
    #   bytes/step ~= (in + out) * double-buffer * C * tile_n * itemsize
    per_lane_bytes = 2 * 2 * C * itemsize
    tile_cap = max(128, (vmem_budget_bytes // per_lane_bytes) // 128 * 128)
    tile_n = min(max_tile_n, tile_cap)

    if N <= tile_n:
        # Single block covers all lanes; if it is large enough, split in two so
        # the grid axis can still be sharded across v7x's two TensorCores.
        if N >= 1024 and N % 256 == 0:
            tile_n = N // 2
        else:
            tile_n = N
    grid = (pl.cdiv(N, tile_n),)

    out = pl.pallas_call(
        _asc_kernel,
        out_shape=jax.ShapeDtypeStruct((C, N), x2.dtype),
        grid_spec=pl.GridSpec(
            grid=grid,
            in_specs=[pl.BlockSpec((C, tile_n), lambda j: (0, j))],
            out_specs=pl.BlockSpec((C, tile_n), lambda j: (0, j)),
        ),
        compiler_params=pltpu.CompilerParams(
            dimension_semantics=("parallel",),
            vmem_limit_bytes=32 * 1024 * 1024,
        ),
    )(x2)
    return out.reshape(orig_shape)


def _asc_ref(x):
    xf = x.astype(jnp.float32)
    return (xf / jnp.sum(xf, axis=0) * 100.0).astype(x.dtype)


if __name__ == "__main__":
    key = jax.random.PRNGKey(0)
    k0, k1, k2 = jax.random.split(key, 3)

    # 1) small float32 case: 4 endmember abundances over 256 pixels (single block)
    C, N = 4, 256
    x = jax.random.uniform(k0, (C, N), dtype=jnp.float32, minval=0.1, maxval=1.0)
    out = jax.block_until_ready(asc(x))
    ref = _asc_ref(x)
    assert out.shape == ref.shape and out.dtype == ref.dtype
    assert jnp.allclose(out, ref, rtol=1e-5, atol=1e-5)

    # 2) multi-step grid path (force small tiles) + bfloat16 input (f32 accumulate inside)
    xb = jax.random.uniform(k1, (6, 384), dtype=jnp.float32,
                            minval=0.1, maxval=1.0).astype(jnp.bfloat16)
    outb = jax.block_until_ready(asc(xb, max_tile_n=128))
    refb = _asc_ref(xb)
    assert outb.shape == refb.shape and outb.dtype == refb.dtype
    assert jnp.allclose(outb.astype(jnp.float32), refb.astype(jnp.float32),
                        rtol=2e-2, atol=2e-2)

    # 3) higher-rank input (non-leading dims flattened into lanes)
    x3 = jax.random.uniform(k2, (4, 8, 16), dtype=jnp.float32, minval=0.1, maxval=1.0)
    out3 = jax.block_until_ready(asc(x3))
    ref3 = _asc_ref(x3)
    assert out3.shape == ref3.shape
    assert jnp.allclose(out3, ref3, rtol=1e-5, atol=1e-5)

    print("KERNEL_OK")
</pallas_src>

<mosaic_0001>
module attributes {stable_mosaic.version = 11 : i64} {
  func.func @_asc_kernel(%arg0: i32, %arg1: memref<4x256xf32, #tpu.memory_space<vmem>>, %arg2: memref<4x256xf32, #tpu.memory_space<vmem>>) attributes {dimension_semantics = [#tpu.dimension_semantics<parallel>], iteration_bounds = array<i64: 1>, scalar_prefetch = 0 : i64, scratch_operands = 0 : i64, tpu.core_type = #tpu.core_type<tc>, window_params = [{transform_indices = @transform_0, window_bounds = array<i64: 4, 256>}, {transform_indices = @transform_1, window_bounds = array<i64: 4, 256>}]} {
    %c0 = arith.constant 0 : index
    %c0_0 = arith.constant 0 : index
    %0 = vector.load %arg1[%c0, %c0_0] : memref<4x256xf32, #tpu.memory_space<vmem>>, vector<4x256xf32>
    %cst = arith.constant dense<0.000000e+00> : vector<256xf32>
    %1 = vector.multi_reduction <add>, %0, %cst [0] : vector<4x256xf32> to vector<256xf32>
    %2 = vector.shape_cast %1 : vector<256xf32> to vector<1x256xf32>
    %3 = tpu.reciprocal %2 : vector<1x256xf32> -> vector<1x256xf32>
    %cst_1 = arith.constant 1.000000e+02 : f32
    %4 = vector.broadcast %cst_1 : f32 to vector<1x256xf32>
    %5 = arith.mulf %3, %4 : vector<1x256xf32>
    %6 = vector.broadcast %5 : vector<1x256xf32> to vector<4x256xf32>
    %7 = arith.mulf %0, %6 : vector<4x256xf32>
    %c0_2 = arith.constant 0 : index
    %c0_3 = arith.constant 0 : index
    %8 = vector.load %arg2[%c0_2, %c0_3] : memref<4x256xf32, #tpu.memory_space<vmem>>, vector<4x256xf32>
    tpu.vector_store %arg2[%c0_2, %c0_3], %7 {strides = array<i32>} : memref<4x256xf32, #tpu.memory_space<vmem>>, vector<4x256xf32>,
    return
  }
  func.func @transform_0(%arg0: i32) -> (i32, i32) {
    %c0_i32 = arith.constant 0 : i32
    %c0_i32_0 = arith.constant 0 : i32
    return %c0_i32, %arg0 : i32, i32
  }
  func.func @transform_1(%arg0: i32) -> (i32, i32) {
    %c0_i32 = arith.constant 0 : i32
    %c0_i32_0 = arith.constant 0 : i32
    return %c0_i32, %arg0 : i32, i32
  }
}

</mosaic_0001>

<llo_original>
// kernel: tpu_custom_call.1
$region0: #{tpu_custom_call.1}
  #allocation0 [shape = 'u32[]', space=smem, size = 0x4, offset = 0x4, fixed_abs, tag = 'smem constant byte address 0x4 - core index']
  #allocation1 [shape = 'u32[144,128]{1,0:T(1,128)}', space=vmem, size = 0x12000, scoped, tag = 'internal scratch']
  %s0 = inlined_call_operand.hbm [shape: f32[4,256], index: 0, kind: input, shape index: {}]
  %s1 = inlined_call_operand.hbm [shape: f32[4,256], index: 1, kind: output, shape index: {}]
  %s2 = sld [smem:[#allocation0]]
  $region18: #{tpu_custom_call.1} parent=0
    _
  %s4 = ssub.s32 1, %s2
  %s5 = scalar_select 0, %s4, %s2
  $region1: #{tpu_custom_call.1} parent=0
    #allocation2 [shape = 'u8[4096]{0}', space=vmem, size = 0x1000, scoped, tag = 'input window, operand 0, single buffered']
    #allocation3 [shape = 's32[1]{0}', space=sflag, size = 0x4, scoped, tag = 'scoped memory for tpu_custom_call.1']
    #allocation4 [shape = 's32[1]{0}', space=sflag, size = 0x4, scoped, tag = 'scoped memory for tpu_custom_call.1']
    #allocation5 [shape = 'u8[4096]{0}', space=vmem, size = 0x1000, scoped, tag = 'output window, operand 0, single buffered']
    %6 = vsyncpa [#allocation3], 0
    %7 = vsyncpa [#allocation4], 0
    // Predicated region
    $region2: #{tpu_custom_call.1} parent=1 // pred_check
      _
    $region3: #{tpu_custom_call.1} parent=1 // pred_check_branch
      %9 = sbr.rel (0) target = $region5
    $region4: #{tpu_custom_call.1} parent=1 // pred_region
      %s11 = ssub.s32 128, 128
      %12 = vsyncadd [#allocation3], %s11
      %s14 = sshll.u32 [#allocation2], 4
      %s15 = int_to_ptr.vmem [resolvable:$true] %s14
      %17 = dma.hbm_to_vmem [thread:$0]  %s0, 128, %s15, [#allocation3]
    $region5: #{tpu_custom_call.1} parent=1 // pred_fallthru
      _
    // Predicated region
    $region6: #{tpu_custom_call.1} parent=1 // pred_check
      _
    $region7: #{tpu_custom_call.1} parent=1 // pred_check_branch
      %19 = sbr.rel (0) target = $region9
    $region8: #{tpu_custom_call.1} parent=1 // pred_region
      %20 = dma.done [#allocation3], 128
    $region9: #{tpu_custom_call.1} parent=1 // pred_fallthru
      _
    %v21 = vld [vmem:[#allocation2] sm:$0xff]
    %v23 = vcombine.high %v21, %v21
    %vm25 = vcmask 1043456
    %v26 = vsel %vm25, %v21, 0.0
    %v27 = vrot.slane %v26, 4
    %v28 = vadd.f32 %v26, %v27
    %v29 = vrot.slane %v28, 2
    %v30 = vadd.f32 %v28, %v29
    %v31 = vrot.slane %v30, 1
    %v32 = vadd.f32 %v30, %v31
    %v33 = vsel %vm25, %v23, 0.0
    %v34 = vrot.slane %v33, 4
    %v35 = vadd.f32 %v33, %v34
    %v36 = vrot.slane %v35, 2
    %v37 = vadd.f32 %v35, %v36
    %v38 = vrot.slane %v37, 1
    %v39 = vadd.f32 %v37, %v38
    %v40 = vrcp.pop %v32
    %v41 = vrcp.pop %v39
    %v42 = vmul.f32 %v40, 100.0
    %v43 = vmul.f32 %v41, 100.0
    %v46 = vcombine.low %v42, %v43
    %v48 = vmul.f32 %v21, %v46
    %49 = vst [vmem:[#allocation5] sm:$0xff] %v48
    // Predicated region
    $region10: #{tpu_custom_call.1} parent=1 // pred_check
      _
    $region11: #{tpu_custom_call.1} parent=1 // pred_check_branch
      %51 = sbr.rel (0) target = $region13
    $region12: #{tpu_custom_call.1} parent=1 // pred_region
      %s53 = ssub.s32 128, 128
      %54 = vsyncadd [#allocation4], %s53
      %s56 = sshll.u32 [#allocation5], 4
      %s57 = int_to_ptr.vmem [resolvable:$true] %s56
      %59 = dma.vmem_to_hbm [thread:$0]  %s57, 128, %s1, [#allocation4]
    $region13: #{tpu_custom_call.1} parent=1 // pred_fallthru
      _
    // Predicated region
    $region14: #{tpu_custom_call.1} parent=1 // pred_check
      _
    $region15: #{tpu_custom_call.1} parent=1 // pred_check_branch
      %61 = sbr.rel (0) target = $region17
    $region16: #{tpu_custom_call.1} parent=1 // pred_region
      %62 = dma.done [#allocation4], 128
    $region17: #{tpu_custom_call.1} parent=1 // pred_fallthru
      _
    %63 = vsyncpa [#allocation3], 1
    %64 = vsyncpa [#allocation4], 1

</llo_original>
